<compile_context>
chip_gen: v5e
topology: v5e:2x2
jax: 0.10.0
libtpu: 0.0.40
codegen_flags: <defaults>
</compile_context>

<pallas_src>
import functools
import math

import jax
import jax.numpy as jnp
from jax.experimental import pallas as pl
from jax.experimental.pallas import tpu as pltpu


def _moco_neg_kernel(q_ref, mem_ref, lneg_ref, *, inv_T):
    # q_ref: (B, D) bf16, mem_ref: (TK, D) bf16, lneg_ref: (B, TK) f32.
    # Contract D of q with D of the queue tile -> (B, TK) on the MXU,
    # consuming the queue tile in its stored layout (no transpose), f32 acc.
    l_neg = jax.lax.dot_general(
        q_ref[...],
        mem_ref[...],
        dimension_numbers=(((1,), (1,)), ((), ())),
        preferred_element_type=jnp.float32,
    )
    lneg_ref[...] = (l_neg * inv_T).astype(lneg_ref.dtype)


def _pick_queue_tile(K, B, D, mem_itemsize, out_itemsize, q_itemsize,
                     vmem_budget_bytes=24 << 20):
    """Largest lane-aligned (x128) divisor of K with grid>=2 that fits VMEM."""
    per_tk = 2 * (D * mem_itemsize + B * out_itemsize)   # double-buffered tiles
    avail = max(vmem_budget_bytes - 2 * B * D * q_itemsize, per_tk * 128)
    tk_cap = max((avail // per_tk), 128)
    tk_cap = (tk_cap // 128) * 128

    best = 0
    d = 128
    limit = min(tk_cap, K - 1)          # d < K guarantees grid >= 2 (megacore)
    while d <= limit:
        if K % d == 0:
            best = d
        d += 128
    if best == 0:
        # TODO(synk): pad K up to a multiple of 128 instead of falling back to
        # a single full-queue block (only hit when K < 256 or K % 128 != 0).
        best = K
    return best


def moco_neg_logits(q, memory, T):
    """l_neg = (q @ memory^T) / T, tiled along the queue dimension."""
    B, D = q.shape
    K, _ = memory.shape

    mem_itemsize = jnp.dtype(memory.dtype).itemsize
    q_itemsize = jnp.dtype(q.dtype).itemsize
    out_itemsize = jnp.dtype(jnp.float32).itemsize

    tk = _pick_queue_tile(K, B, D, mem_itemsize, out_itemsize, q_itemsize)

    footprint = (2 * (tk * D * mem_itemsize + B * tk * out_itemsize)
                 + 2 * B * D * q_itemsize)
    vmem_limit = int(min(max(32 << 20, footprint + (2 << 20)), 64 << 20))

    kernel = functools.partial(_moco_neg_kernel, inv_T=1.0 / T)
    cost = pl.CostEstimate(
        flops=2 * B * K * D,
        transcendentals=0,
        bytes_accessed=(K * D * mem_itemsize
                        + B * D * q_itemsize
                        + B * K * out_itemsize),
    )

    return pl.pallas_call(
        kernel,
        out_shape=jax.ShapeDtypeStruct((B, K), jnp.float32),
        grid_spec=pltpu.PrefetchScalarGridSpec(
            num_scalar_prefetch=0,
            grid=(K // tk,),
            in_specs=[
                pl.BlockSpec((B, D), lambda j: (0, 0)),    # q: resident, reused
                pl.BlockSpec((tk, D), lambda j: (j, 0)),   # queue tile, pipelined
            ],
            out_specs=pl.BlockSpec((B, tk), lambda j: (0, j)),  # lane-dense block
        ),
        compiler_params=pltpu.CompilerParams(
            dimension_semantics=("parallel",),
            vmem_limit_bytes=vmem_limit,
        ),
        cost_estimate=cost,
    )(q, memory)


@functools.partial(jax.jit, static_argnames=("T",), donate_argnums=(2,))
def _moco_step(q, k, memory, index, *, T):
    """One MoCo forward step: logits + in-place (donated) queue update."""
    k = jax.lax.stop_gradient(k)
    B, _ = q.shape
    K = memory.shape[0]
    inv_T = 1.0 / T

    # Positive logits: O(B*D), negligible; kept f32 for accuracy.
    l_pos = jnp.sum(
        q.astype(jnp.float32) * k.astype(jnp.float32), axis=-1, keepdims=True
    ) * inv_T

    # Negative logits from the Pallas kernel (bf16 stream, f32 accumulate,
    # already scaled by 1/T).
    l_neg = moco_neg_logits(q.astype(memory.dtype), memory, T)

    # Torch-parity output layout.  TODO(synk): return (l_pos, l_neg) and fuse
    # in the loss to remove this extra (B, K) copy.
    out = jnp.concatenate((l_pos, l_neg), axis=1)
    out = jnp.squeeze(out)  # matches torch .squeeze()

    # Queue update (torch memory.index_copy_): single scatter on the donated
    # buffer -- B*D bytes written, no full-queue copy, handles wrap-around.
    # Duplicate indices (only possible if B > K) are last-write-wins by
    # convention, matching torch's unspecified behavior.
    positions = (index + jnp.arange(B, dtype=jnp.int32)) % K
    new_memory = memory.at[positions].set(k.astype(memory.dtype))
    return out, new_memory


class MemoryMoCoJax:
    """Fixed-size queue with momentum encoder (JAX / Pallas version)."""

    def __init__(self, inputSize, K, T=0.07, seed=0, memory_dtype=jnp.bfloat16):
        self.queueSize = K
        self.inputSize = inputSize
        self.T = T
        self.index = 0
        stdv = 1.0 / math.sqrt(inputSize / 3)
        key = jax.random.PRNGKey(seed)
        # torch.rand(K, D).mul_(2*stdv).add_(-stdv)  ==  U[-stdv, stdv)
        mem_f32 = (
            jax.random.uniform(key, (K, inputSize), dtype=jnp.float32)
            * (2.0 * stdv)
            - stdv
        )
        self.memory = mem_f32.astype(memory_dtype)
        print("using queue shape: ({},{})".format(self.queueSize, inputSize))

    def forward(self, q, k):
        batchSize = q.shape[0]
        assert batchSize <= self.queueSize, "batch must not exceed queue size"
        out, new_memory = _moco_step(
            q, k, self.memory, jnp.int32(self.index), T=self.T
        )
        self.memory = new_memory
        self.index = (self.index + batchSize) % self.queueSize
        return out


if __name__ == "__main__":
    # Small shapes consistent with the module: hidden=32, batch=8.
    # Queue K=512: the auto tile picker chooses tk=256 -> grid=(2,).
    inputSize = 32
    K = 512
    B = 8

    moco = MemoryMoCoJax(inputSize, K, T=0.07, seed=0)

    key = jax.random.PRNGKey(0)
    kq, kk = jax.random.split(key)
    q = jax.random.normal(kq, (B, inputSize), dtype=jnp.float32)
    k = jax.random.normal(kk, (B, inputSize), dtype=jnp.float32)

    # Copy before the step: the queue buffer is donated (updated in place).
    mem_before = jax.block_until_ready(jnp.copy(moco.memory))  # bf16 queue

    out = jax.block_until_ready(moco.forward(q, k))

    # Reference 1 (kernel contract): bf16 operands, f32 accumulation.
    q_b = q.astype(jnp.bfloat16).astype(jnp.float32)
    mem_b = mem_before.astype(jnp.float32)
    ref_neg = jnp.dot(q_b, mem_b.T, precision=jax.lax.Precision.HIGHEST) / 0.07
    ref_pos = jnp.sum(q * k, axis=-1, keepdims=True) / 0.07
    ref = jnp.concatenate((ref_pos, ref_neg), axis=1)
    assert out.shape == (B, K + 1), out.shape
    assert jnp.allclose(out, ref, rtol=1e-3, atol=1e-3), float(
        jnp.max(jnp.abs(out - ref))
    )

    # Reference 2 (semantics sanity vs. full-precision q): loose tolerance for
    # bf16 streaming of q.
    ref_f32 = jnp.concatenate(
        (ref_pos,
         jnp.dot(q, mem_b.T, precision=jax.lax.Precision.HIGHEST) / 0.07),
        axis=1,
    )
    assert jnp.allclose(out, ref_f32, rtol=5e-2, atol=0.5)

    # Queue rows 0..B-1 now hold k (cast to the queue dtype); rest unchanged.
    assert jnp.allclose(
        moco.memory[:B].astype(jnp.float32),
        k.astype(jnp.bfloat16).astype(jnp.float32),
    )
    assert jnp.allclose(
        moco.memory[B:].astype(jnp.float32),
        mem_before[B:].astype(jnp.float32),
    )
    assert moco.index == B

    # Second step exercises the rolling index / recompile-free path.
    out2 = jax.block_until_ready(moco.forward(q, k))
    assert out2.shape == (B, K + 1)
    assert jnp.allclose(
        moco.memory[B:2 * B].astype(jnp.float32),
        k.astype(jnp.bfloat16).astype(jnp.float32),
    )

    print("KERNEL_OK")
</pallas_src>

<mosaic_0001>
module attributes {stable_mosaic.version = 11 : i64} {
  func.func @_moco_neg_kernel(%arg0: i32, %arg1: memref<8x32xbf16, #tpu.memory_space<vmem>>, %arg2: memref<256x32xbf16, #tpu.memory_space<vmem>>, %arg3: memref<8x256xf32, #tpu.memory_space<vmem>>) attributes {dimension_semantics = [#tpu.dimension_semantics<parallel>], iteration_bounds = array<i64: 2>, scalar_prefetch = 0 : i64, scratch_operands = 0 : i64, tpu.core_type = #tpu.core_type<tc>, window_params = [{pipeline_mode = #tpu.pipeline_mode<synchronous>, transform_indices = @transform_0, window_bounds = array<i64: 8, 32>}, {transform_indices = @transform_1, window_bounds = array<i64: 256, 32>}, {transform_indices = @transform_2, window_bounds = array<i64: 8, 256>}]} {
    %c0 = arith.constant 0 : index
    %c0_0 = arith.constant 0 : index
    %0 = vector.load %arg1[%c0, %c0_0] : memref<8x32xbf16, #tpu.memory_space<vmem>>, vector<8x32xbf16>
    %c0_1 = arith.constant 0 : index
    %c0_2 = arith.constant 0 : index
    %1 = vector.load %arg2[%c0_1, %c0_2] : memref<256x32xbf16, #tpu.memory_space<vmem>>, vector<256x32xbf16>
    %cst = arith.constant dense<0.000000e+00> : vector<8x256xf32>
    %2 = tpu.matmul %0, %1, %cst {dimension_numbers = #tpu.dot_dimension_numbers<[1], [1], [0], [0], [0, 0, 1, 0], [], []>} : vector<8x32xbf16>, vector<256x32xbf16>, vector<8x256xf32> -> vector<8x256xf32>
    %cst_3 = arith.constant 14.2857141 : f32
    %3 = vector.broadcast %cst_3 : f32 to vector<8x256xf32>
    %4 = arith.mulf %2, %3 : vector<8x256xf32>
    %c0_4 = arith.constant 0 : index
    %c0_5 = arith.constant 0 : index
    %5 = vector.load %arg3[%c0_4, %c0_5] : memref<8x256xf32, #tpu.memory_space<vmem>>, vector<8x256xf32>
    tpu.vector_store %arg3[%c0_4, %c0_5], %4 {strides = array<i32>} : memref<8x256xf32, #tpu.memory_space<vmem>>, vector<8x256xf32>,
    return
  }
  func.func @transform_0(%arg0: i32) -> (i32, i32) {
    %c0_i32 = arith.constant 0 : i32
    %c0_i32_0 = arith.constant 0 : i32
    %c0_i32_1 = arith.constant 0 : i32
    return %c0_i32, %c0_i32_0 : i32, i32
  }
  func.func @transform_1(%arg0: i32) -> (i32, i32) {
    %c0_i32 = arith.constant 0 : i32
    %c0_i32_0 = arith.constant 0 : i32
    return %arg0, %c0_i32 : i32, i32
  }
  func.func @transform_2(%arg0: i32) -> (i32, i32) {
    %c0_i32 = arith.constant 0 : i32
    %c0_i32_0 = arith.constant 0 : i32
    return %c0_i32, %arg0 : i32, i32
  }
}

</mosaic_0001>

<llo_original>
// kernel: _moco_step.1
$region0: #{_moco_step.1}
  #allocation0 [shape = 'u32[]', space=smem, size = 0x4, offset = 0x4, fixed_abs, tag = 'smem constant byte address 0x4 - core index']
  #allocation1 [shape = 'u32[72,128]{1,0:T(1,128)}', space=vmem, size = 0x9000, scoped, tag = 'internal scratch']
  %s0 = inlined_call_operand.vmem [shape: bf16[8,32], index: 0, kind: input, shape index: {}]
  %s1 = inlined_call_operand.vmem [shape: bf16[512,32], index: 1, kind: input, shape index: {}]
  %s2 = inlined_call_operand.vmem [shape: f32[8,512], index: 2, kind: output, shape index: {}]
  %s3 = sld [smem:[#allocation0]]
  $region41: #{_moco_step.1} parent=0
    _
  %s5 = ssub.s32 1, %s3
  %s6 = scalar_select 0, %s5, %s3
  loop: start=0, step=1, limit=4
  $region2: #{_moco_step.1} parent=0 // loop_pre_header
    _
  $region3: #{_moco_step.1} parent=0 // loop_header
    %s8 = sphi 0, %s12
    %p9 = scmp.ge.s32.totalorder %s8, 4
    %s16 = sphi 0, %s16
    %s18 = sphi 0, %s16
    %s19 = sphi 0, %s18
    %s33 = sphi 0, %s19
    %s39 = sphi 0, %s41
    %s42 = sphi 0, %s39
    %s43 = sphi 0, %s42
    %s59 = sphi 0, %s43
    %s65 = sphi 0, %s67
    %s68 = sphi 0, %s65
    %s69 = sphi 0, %s68
    %s85 = sphi 0, %s69
  $region4: #{_moco_step.1} parent=0 // loop_header_branch
    %11 = sbr.rel (%p9) target = $region8
  $region5: #{_moco_step.1} parent=0 // loop_body
    %s13 = ssub.s32 %s8, 1
    %s14 = ssub.s32 %s8, 2
    %s15 = sadd.s32 %s8, 1
    %s17 = sadd.s32 %s16, 1
    %p20 = scmp.eq.s32.totalorder %s8, 1
    %p21 = scmp.ne.s32.totalorder %s16, %s18
    %p22 = scmp.eq.s32.totalorder %s8, 0
    %p23 = por %p21, %p22
    %p24 = scmp.ne.s32.totalorder %s16, %s18
    %p25 = scmp.eq.s32.totalorder %s13, 1
    %p26 = por %p24, %p25
    %p27 = scmp.ne.s32.totalorder %s18, %s19
    %p28 = scmp.eq.s32.totalorder %s13, 0
    %p29 = por %p27, %p28
    %p30 = scmp.ne.s32.totalorder %s18, %s19
    %p31 = scmp.eq.s32.totalorder %s14, 1
    %p32 = por %p30, %p31
    %p34 = scmp.ne.s32.totalorder %s19, %s33
    %p35 = scmp.eq.s32.totalorder %s14, 0
    %p36 = por %p34, %p35
    %s37 = ssub.s32 %s8, %s15
    %p38 = scmp.eq.s32.totalorder %s37, 0
    %s40 = sadd.s32 %s39, 1
    %s41 = scalar_select %p38, %s39, %s40
    %p44 = pneg %p38
    %p45 = scmp.eq.s32.totalorder %s8, 1
    %p46 = por %p44, %p45
    %p47 = scmp.ne.s32.totalorder %s39, %s42
    %p48 = scmp.eq.s32.totalorder %s8, 0
    %p49 = por %p47, %p48
    %p50 = scmp.ne.s32.totalorder %s39, %s42
    %p51 = scmp.eq.s32.totalorder %s13, 1
    %p52 = por %p50, %p51
    %p53 = scmp.ne.s32.totalorder %s42, %s43
    %p54 = scmp.eq.s32.totalorder %s13, 0
    %p55 = por %p53, %p54
    %p56 = scmp.ne.s32.totalorder %s42, %s43
    %p57 = scmp.eq.s32.totalorder %s14, 1
    %p58 = por %p56, %p57
    %p60 = scmp.ne.s32.totalorder %s43, %s59
    %p61 = scmp.eq.s32.totalorder %s14, 0
    %p62 = por %p60, %p61
    %s63 = ssub.s32 %s8, %s15
    %p64 = scmp.eq.s32.totalorder %s63, 0
    %s66 = sadd.s32 %s65, 1
    %s67 = scalar_select %p64, %s65, %s66
    %p70 = pneg %p64
    %p71 = scmp.eq.s32.totalorder %s8, 1
    %p72 = por %p70, %p71
    %p73 = scmp.ne.s32.totalorder %s65, %s68
    %p74 = scmp.eq.s32.totalorder %s8, 0
    %p75 = por %p73, %p74
    %p76 = scmp.ne.s32.totalorder %s65, %s68
    %p77 = scmp.eq.s32.totalorder %s13, 1
    %p78 = por %p76, %p77
    %p79 = scmp.ne.s32.totalorder %s68, %s69
    %p80 = scmp.eq.s32.totalorder %s13, 0
    %p81 = por %p79, %p80
    %p82 = scmp.ne.s32.totalorder %s68, %s69
    %p83 = scmp.eq.s32.totalorder %s14, 1
    %p84 = por %p82, %p83
    %p86 = scmp.ne.s32.totalorder %s69, %s85
    %p87 = scmp.eq.s32.totalorder %s14, 0
    %p88 = por %p86, %p87
    %p89 = scmp.le.s32.totalorder 1, %s8
    %p90 = scmp.lt.s32.totalorder %s8, 3
    %p91 = pnand %p89, %p90
    %p92 = pneg %p91
    // Predicated region
    $region9: #{_moco_step.1} parent=5 // pred_check
      _
    $region10: #{_moco_step.1} parent=5 // pred_check_branch
      %94 = sbr.rel (%p91) target = $region12
    $region11: #{_moco_step.1} parent=5 // pred_region
      %s95 = ssub.s32 %s8, 1
      // Predicated region
      $region13: #{_moco_step.1} parent=11 // pred_check
        %p96 = pneg %p29
      $region14: #{_moco_step.1} parent=11 // pred_check_branch
        %98 = sbr.rel (%p96) target = $region16
      $region15: #{_moco_step.1} parent=11 // pred_region
        _
      $region16: #{_moco_step.1} parent=11 // pred_fallthru
        _
    $region12: #{_moco_step.1} parent=5 // pred_fallthru
      _
    %p99 = scmp.lt.s32.totalorder %s8, 2
    // Predicated region
    $region17: #{_moco_step.1} parent=5 // pred_check
      %p100 = pneg %p99
    $region18: #{_moco_step.1} parent=5 // pred_check_branch
      %102 = sbr.rel (%p100) target = $region20
    $region19: #{_moco_step.1} parent=5 // pred_region
      // Predicated region
      $region21: #{_moco_step.1} parent=19 // pred_check
        %p103 = pneg %p49
      $region22: #{_moco_step.1} parent=19 // pred_check_branch
        %105 = sbr.rel (%p103) target = $region24
      $region23: #{_moco_step.1} parent=19 // pred_region
        %s106 = smul.u32 32, %s8
        %p107 = scmp.lt.s32.totalorder %s106, 63
        %s108 = scalar_select %p107, %s106, 63
        %s109 = smul.addr %s108, 4
        %s110 = scalar_lea.vmem %s1, %s109
        %s111 = smul.u32 32, %s8
      $region24: #{_moco_step.1} parent=19 // pred_fallthru
        _
    $region20: #{_moco_step.1} parent=5 // pred_fallthru
      _
    %p112 = scmp.le.s32.totalorder 1, %s8
    %p113 = scmp.lt.s32.totalorder %s8, 3
    %p114 = pnand %p112, %p113
    %p115 = pneg %p114
    // Predicated region
    $region25: #{_moco_step.1} parent=5 // pred_check
      _
    $region26: #{_moco_step.1} parent=5 // pred_check_branch
      %117 = sbr.rel (%p114) target = $region28
    $region27: #{_moco_step.1} parent=5 // pred_region
      %s118 = ssub.s32 %s8, 1
      %p119 = pneg %p29
      %p120 = pneg %p26
      %s121 = smul.u32 32, %s13
      %p122 = scmp.lt.s32.totalorder %s121, 63
      %s123 = scalar_select %p122, %s121, 63
      %s124 = smul.addr %s123, 4
      %s125 = scalar_lea.vmem %s1, %s124
      %p126 = pneg %p55
      %p127 = pneg %p52
      %p128 = pneg %p81
      %p129 = pneg %p78
      %s130 = smul.u32 2, %s13
      %p131 = scmp.lt.s32.totalorder %s130, 3
      %s132 = scalar_select %p131, %s130, 3
      %s133 = smul.addr %s132, 8
      %s134 = scalar_lea.vmem %s2, %s133
      %s135 = smul.u32 32, %s13
      %p136 = scmp.lt.s32.totalorder %s135, 63
      %s137 = scalar_select %p136, %s135, 63
      %s138 = smul.addr %s137, 4
      %s139 = scalar_lea.vmem %s1, %s138
      %s140 = smul.u32 32, %s13
      %s141 = smul.u32 2, %s13
      %p142 = scmp.lt.s32.totalorder %s141, 3
      %s143 = scalar_select %p142, %s141, 3
      %s144 = smul.addr %s143, 8
      %s145 = scalar_lea.vmem %s2, %s144
      %s146 = smul.u32 2, %s13
      %v147 = vld [vmem:[%s0] sm:$0xf]
      %v148 = vld [vmem:[%s139] sm:$0xf]
      %v149 = vld [vmem:[%s139 + $0x4] sm:$0xf]
      %v150 = vld [vmem:[%s139 + $0x8] sm:$0xf]
      %v151 = vld [vmem:[%s139 + $0xc] sm:$0xf]
      %v152 = vld [vmem:[%s139 + $0x10] sm:$0xf]
      %v153 = vld [vmem:[%s139 + $0x14] sm:$0xf]
      %v154 = vld [vmem:[%s139 + $0x18] sm:$0xf]
      %v155 = vld [vmem:[%s139 + $0x1c] sm:$0xf]
      %v156 = vld [vmem:[%s139 + $0x20] sm:$0xf]
      %v157 = vld [vmem:[%s139 + $0x24] sm:$0xf]
      %v158 = vld [vmem:[%s139 + $0x28] sm:$0xf]
      %v159 = vld [vmem:[%s139 + $0x2c] sm:$0xf]
      %v160 = vld [vmem:[%s139 + $0x30] sm:$0xf]
      %v161 = vld [vmem:[%s139 + $0x34] sm:$0xf]
      %v162 = vld [vmem:[%s139 + $0x38] sm:$0xf]
      %v163 = vld [vmem:[%s139 + $0x3c] sm:$0xf]
      %v164 = vld [vmem:[%s139 + $0x40] sm:$0xf]
      %v165 = vld [vmem:[%s139 + $0x44] sm:$0xf]
      %v166 = vld [vmem:[%s139 + $0x48] sm:$0xf]
      %v167 = vld [vmem:[%s139 + $0x4c] sm:$0xf]
      %v168 = vld [vmem:[%s139 + $0x50] sm:$0xf]
      %v169 = vld [vmem:[%s139 + $0x54] sm:$0xf]
      %v170 = vld [vmem:[%s139 + $0x58] sm:$0xf]
      %v171 = vld [vmem:[%s139 + $0x5c] sm:$0xf]
      %v172 = vld [vmem:[%s139 + $0x60] sm:$0xf]
      %v173 = vld [vmem:[%s139 + $0x64] sm:$0xf]
      %v174 = vld [vmem:[%s139 + $0x68] sm:$0xf]
      %v175 = vld [vmem:[%s139 + $0x6c] sm:$0xf]
      %v176 = vld [vmem:[%s139 + $0x70] sm:$0xf]
      %v177 = vld [vmem:[%s139 + $0x74] sm:$0xf]
      %v178 = vld [vmem:[%s139 + $0x78] sm:$0xf]
      %v179 = vld [vmem:[%s139 + $0x7c] sm:$0xf]
      %v212 = vunpack.c.l.b16 %v148
      %v213 = vunpack.c.l.b16 %v149
      %v214 = vunpack.c.l.b16 %v150
      %v215 = vunpack.c.l.b16 %v151
      %v216 = vunpack.c.l.b16 %v152
      %v217 = vunpack.c.l.b16 %v153
      %v218 = vunpack.c.l.b16 %v154
      %v219 = vunpack.c.l.b16 %v155
      %v220 = vunpack.c.l.b16 %v156
      %v221 = vunpack.c.l.b16 %v157
      %v222 = vunpack.c.l.b16 %v158
      %v223 = vunpack.c.l.b16 %v159
      %v224 = vunpack.c.l.b16 %v160
      %v225 = vunpack.c.l.b16 %v161
      %v226 = vunpack.c.l.b16 %v162
      %v227 = vunpack.c.l.b16 %v163
      %v228 = vunpack.c.l.b16 %v164
      %v229 = vunpack.c.l.b16 %v165
      %v230 = vunpack.c.l.b16 %v166
      %v231 = vunpack.c.l.b16 %v167
      %v232 = vunpack.c.l.b16 %v168
      %v233 = vunpack.c.l.b16 %v169
      %v234 = vunpack.c.l.b16 %v170
      %v235 = vunpack.c.l.b16 %v171
      %v236 = vunpack.c.l.b16 %v172
      %v237 = vunpack.c.l.b16 %v173
      %v238 = vunpack.c.l.b16 %v174
      %v239 = vunpack.c.l.b16 %v175
      %v240 = vunpack.c.l.b16 %v176
      %v241 = vunpack.c.l.b16 %v177
      %v242 = vunpack.c.l.b16 %v178
      %v243 = vunpack.c.l.b16 %v179
      %v244 = vpack.c.b16 %v213, %v212
      %v245 = vpack.c.b16 %v215, %v214
      %v246 = vpack.c.b16 %v217, %v216
      %v247 = vpack.c.b16 %v219, %v218
      %v248 = vpack.c.b16 %v221, %v220
      %v249 = vpack.c.b16 %v223, %v222
      %v250 = vpack.c.b16 %v225, %v224
      %v251 = vpack.c.b16 %v227, %v226
      %v252 = vpack.c.b16 %v229, %v228
      %v253 = vpack.c.b16 %v231, %v230
      %v254 = vpack.c.b16 %v233, %v232
      %v255 = vpack.c.b16 %v235, %v234
      %v256 = vpack.c.b16 %v237, %v236
      %v257 = vpack.c.b16 %v239, %v238
      %v258 = vpack.c.b16 %v241, %v240
      %v259 = vpack.c.b16 %v243, %v242
      %vm260 = vcmask 261120
      %v262 = vsel %vm260, %v147, 0
      %v265 = vsel %vm260, %v244, 0
      %v268 = vsel %vm260, %v245, 0
      %v271 = vsel %vm260, %v246, 0
      %v274 = vsel %vm260, %v247, 0
      %v277 = vsel %vm260, %v248, 0
      %v280 = vsel %vm260, %v249, 0
      %v283 = vsel %vm260, %v250, 0
      %v286 = vsel %vm260, %v251, 0
      %v289 = vsel %vm260, %v252, 0
      %v292 = vsel %vm260, %v253, 0
      %v295 = vsel %vm260, %v254, 0
      %v298 = vsel %vm260, %v255, 0
      %v301 = vsel %vm260, %v256, 0
      %v304 = vsel %vm260, %v257, 0
      %v307 = vsel %vm260, %v258, 0
      %v310 = vsel %vm260, %v259, 0
      %312 = vmatpush.bf16.xpose.msra.mxu0 %v286
      %313 = vmatpush.bf16.xpose.msra.mxu0 %v283
      %314 = vmatpush.bf16.xpose.msra.mxu0 %v280
      %315 = vmatpush.bf16.xpose.msra.mxu0 %v277
      %316 = vmatpush.bf16.xpose.msra.mxu0 %v274
      %317 = vmatpush.bf16.xpose.msra.mxu0 %v271
      %318 = vmatpush.bf16.xpose.msra.mxu0 %v268
      %319 = vmatpush.bf16.xpose.msra.mxu0 %v265
      %320 = vmatmul.bf16.gmra.mxu0 %v262
      %v321 = vpop.f32.mrf.mxu0
      %v322 = vadd.f32 0.0, %v321
      %v323 = vpop.f32.mrf.mxu0
      %324 = vdwg.mxu0
      %325 = vmatpush.bf16.xpose.msra.mxu0 %v310
      %326 = vmatpush.bf16.xpose.msra.mxu0 %v307
      %327 = vmatpush.bf16.xpose.msra.mxu0 %v304
      %328 = vmatpush.bf16.xpose.msra.mxu0 %v301
      %329 = vmatpush.bf16.xpose.msra.mxu0 %v298
      %330 = vmatpush.bf16.xpose.msra.mxu0 %v295
      %331 = vmatpush.bf16.xpose.msra.mxu0 %v292
      %332 = vmatpush.bf16.xpose.msra.mxu0 %v289
      %333 = vmatmul.bf16.gmra.mxu0 %v262
      %v334 = vpop.f32.mrf.mxu0
      %v335 = vadd.f32 0.0, %v334
      %v336 = vpop.f32.mrf.mxu0
      %337 = vdwg.mxu0
      %v338 = vmul.f32 %v322, 14.285714
      %v339 = vmul.f32 %v335, 14.285714
      %340 = vst [vmem:[%s145] sm:$0xff] %v338
      %341 = vst [vmem:[%s145 + $0x8] sm:$0xff] %v339
      %s342 = smul.u32 2, %s13
      %p343 = scmp.lt.s32.totalorder %s342, 3
      %s344 = scalar_select %p343, %s342, 3
      %s345 = smul.addr %s344, 8
      %s346 = scalar_lea.vmem %s2, %s345
      // Predicated region
      $region29: #{_moco_step.1} parent=27 // pred_check
        %p347 = pneg %p78
      $region30: #{_moco_step.1} parent=27 // pred_check_branch
        %349 = sbr.rel (%p347) target = $region32
      $region31: #{_moco_step.1} parent=27 // pred_region
        %s350 = smul.u32 2, %s13
      $region32: #{_moco_step.1} parent=27 // pred_fallthru
        _
    $region28: #{_moco_step.1} parent=5 // pred_fallthru
      _
    %p351 = scmp.le.s32.totalorder 2, %s8
    // Predicated region
    $region33: #{_moco_step.1} parent=5 // pred_check
      %p352 = pneg %p351
    $region34: #{_moco_step.1} parent=5 // pred_check_branch
      %354 = sbr.rel (%p352) target = $region36
    $region35: #{_moco_step.1} parent=5 // pred_region
      %s355 = ssub.s32 %s8, 2
      // Predicated region
      $region37: #{_moco_step.1} parent=35 // pred_check
        %p356 = pneg %p84
      $region38: #{_moco_step.1} parent=35 // pred_check_branch
        %358 = sbr.rel (%p356) target = $region40
      $region39: #{_moco_step.1} parent=35 // pred_region
        %s359 = smul.u32 2, %s14
        %p360 = scmp.lt.s32.totalorder %s359, 3
        %s361 = scalar_select %p360, %s359, 3
        %s362 = smul.addr %s361, 8
        %s363 = scalar_lea.vmem %s2, %s362
      $region40: #{_moco_step.1} parent=35 // pred_fallthru
        _
    $region36: #{_moco_step.1} parent=5 // pred_fallthru
      _
  $region6: #{_moco_step.1} parent=0 // loop_footer
    %s12 = sadd.s32 1, %s8
  $region7: #{_moco_step.1} parent=0 // loop_footer_branch
    %7 = sbr.rel target = $region3
  $region8: #{_moco_step.1} parent=0 // loop_exit
    _

</llo_original>
